<compile_context>
chip_gen: v7x
topology: tpu7x:2x2x1
jax: 0.10.0
libtpu: 0.0.40
codegen_flags: <defaults>
</compile_context>

<pallas_src>
import jax
import jax.numpy as jnp
from jax.experimental import pallas as pl
from jax.experimental.pallas import tpu as pltpu

LANE = 128  # lane width for the hidden (matmul-heavy) dims


def _round_up(x, m):
    return ((x + m - 1) // m) * m


def _choose_tile(batch, max_tb=512):
    """Adaptive batch tile: small batches -> one small step; big batches -> 512-row
    tiles; keep >=2 grid steps for v7x megacore sharding when the batch is large."""
    tb = min(_round_up(batch, 8), max_tb)
    if _round_up(batch, tb) // tb < 2 and tb > 256:
        tb = _round_up((batch + 1) // 2, 8)
    b_pad = _round_up(batch, tb)
    return tb, b_pad


def policy_mlp_kernel(x_ref, w1_ref, b1_ref, w2_ref, b2_ref, w3_ref, b3_ref, o_ref):
    """Fused 3-layer MLP: relu(xW1+b1) -> relu(.W2+b2) -> tanh(.W3+b3).

    x_ref is f32 (cast to bf16 in-kernel), weights are bf16, biases f32;
    accumulation and the epilogue run in f32.
    """
    x = x_ref[...].astype(jnp.bfloat16)                              # (TB, IN_P)
    h1 = jnp.dot(x, w1_ref[...], preferred_element_type=jnp.float32) + b1_ref[...]
    h1 = jnp.maximum(h1, 0.0)                                        # (TB, HID_P) f32
    h2 = jnp.dot(h1.astype(jnp.bfloat16), w2_ref[...],
                 preferred_element_type=jnp.float32) + b2_ref[...]
    h2 = jnp.maximum(h2, 0.0)                                        # (TB, HID_P) f32
    h3 = jnp.dot(h2.astype(jnp.bfloat16), w3_ref[...],
                 preferred_element_type=jnp.float32) + b3_ref[...]   # (TB, OUT) f32
    o_ref[...] = jnp.tanh(h3).astype(o_ref.dtype)


def policy_network_forward(state, packed, *, max_tb=512):
    """state: [B, input_size] float32.  packed: dict from pack_params()."""
    w1, b1, w2, b2, w3, b3 = (packed["w1"], packed["b1"], packed["w2"],
                              packed["b2"], packed["w3"], packed["b3"])
    in_size, _, out_size = packed["dims"]          # logical sizes
    in_p, hid_p = w1.shape                         # in_p = round_up(in_size, 8)

    B = state.shape[0]
    tb, b_pad = _choose_tile(B, max_tb)

    # Pad only the batch dim (and input features to a sublane multiple) in f32.
    # No 128-lane / bf16 inflation of the input in HBM.
    if b_pad != B or in_p != in_size:
        x = jnp.zeros((b_pad, in_p), dtype=state.dtype)
        x = x.at[:B, :in_size].set(state)
    else:
        x = state

    grid = (b_pad // tb,)
    out = pl.pallas_call(
        policy_mlp_kernel,
        out_shape=jax.ShapeDtypeStruct((b_pad, out_size), jnp.float32),
        grid=grid,
        in_specs=[
            pl.BlockSpec((tb, in_p), lambda i: (i, 0)),        # state: tiled over batch
            pl.BlockSpec((in_p, hid_p), lambda i: (0, 0)),     # W1 resident
            pl.BlockSpec((1, hid_p), lambda i: (0, 0)),        # b1 resident
            pl.BlockSpec((hid_p, hid_p), lambda i: (0, 0)),    # W2 resident
            pl.BlockSpec((1, hid_p), lambda i: (0, 0)),        # b2 resident
            pl.BlockSpec((hid_p, out_size), lambda i: (0, 0)), # W3 resident (logical N)
            pl.BlockSpec((1, out_size), lambda i: (0, 0)),     # b3 resident
        ],
        out_specs=pl.BlockSpec((tb, out_size), lambda i: (i, 0)),
        compiler_params=pltpu.CompilerParams(
            dimension_semantics=("parallel",),                 # shard batch across TCs (v7x)
        ),
    )(x, w1, b1, w2, b2, w3, b3)

    return out[:B]


def init_params(key, input_size, hidden_size, output_size):
    """Logical (unpadded) f32 params, PyTorch nn.Linear-style init.
    Weights stored transposed: [in_features, out_features]."""
    ks = jax.random.split(key, 6)

    def linear(kw, kb, fan_in, fan_out):
        bound = 1.0 / jnp.sqrt(fan_in)
        w = jax.random.uniform(kw, (fan_in, fan_out), jnp.float32, -bound, bound)
        b = jax.random.uniform(kb, (1, fan_out), jnp.float32, -bound, bound)
        return w, b

    w1, b1 = linear(ks[0], ks[1], input_size, hidden_size)
    w2, b2 = linear(ks[2], ks[3], hidden_size, hidden_size)
    w3, b3 = linear(ks[4], ks[5], hidden_size, output_size)
    return {"w1": w1, "b1": b1, "w2": w2, "b2": b2, "w3": w3, "b3": b3,
            "dims": (input_size, hidden_size, output_size)}


def pack_params(p, matmul_dtype=jnp.bfloat16):
    """One-time packing: hidden dims padded to 128 lanes, input dim only to a sublane
    multiple (stays narrow), output dim left at its logical width so the final store is
    only the logical columns. Zero padding is exact through ReLU/tanh."""
    in_size, hidden_size, output_size = p["dims"]
    in_p = _round_up(in_size, 8)
    hid_p = _round_up(hidden_size, LANE)

    def pad(a, rows, cols, dtype):
        out = jnp.zeros((rows, cols), dtype=dtype)
        return out.at[:a.shape[0], :a.shape[1]].set(a.astype(dtype))

    return {
        "w1": pad(p["w1"], in_p, hid_p, matmul_dtype),
        "b1": pad(p["b1"], 1, hid_p, jnp.float32),
        "w2": pad(p["w2"], hid_p, hid_p, matmul_dtype),
        "b2": pad(p["b2"], 1, hid_p, jnp.float32),
        "w3": pad(p["w3"], hid_p, output_size, matmul_dtype),
        "b3": p["b3"].astype(jnp.float32),
        "dims": (in_size, hidden_size, output_size),
    }


def reference_forward(state, p):
    """Pure f32 JAX reference matching the PyTorch module."""
    h1 = jax.nn.relu(state @ p["w1"] + p["b1"])
    h2 = jax.nn.relu(h1 @ p["w2"] + p["b2"])
    return jnp.tanh(h2 @ p["w3"] + p["b3"])


if __name__ == "__main__":
    key = jax.random.PRNGKey(0)
    k_params, k_state, k_state2 = jax.random.split(key, 3)

    input_size = 8
    hidden_size = 32
    output_size = 4

    params = init_params(k_params, input_size, hidden_size, output_size)
    packed = pack_params(params)

    # Small batch (B=2): one tiny 8-row grid step.
    state = jax.random.normal(k_state, (2, input_size), jnp.float32)
    out = jax.block_until_ready(policy_network_forward(state, packed))
    ref = reference_forward(state, params)
    assert out.shape == (2, output_size)
    assert jnp.allclose(out, ref, atol=2e-2, rtol=2e-2)

    # Larger batch: exercises multi-step grid + batch padding/slicing.
    state2 = jax.random.normal(k_state2, (600, input_size), jnp.float32)
    out2 = jax.block_until_ready(policy_network_forward(state2, packed))
    ref2 = reference_forward(state2, params)
    assert out2.shape == (600, output_size)
    assert jnp.allclose(out2, ref2, atol=2e-2, rtol=2e-2)

    print("KERNEL_OK")
</pallas_src>

<mosaic_0001>
module attributes {stable_mosaic.version = 11 : i64} {
  func.func @policy_mlp_kernel(%arg0: i32, %arg1: memref<8x8xf32, #tpu.memory_space<vmem>>, %arg2: memref<8x128xbf16, #tpu.memory_space<vmem>>, %arg3: memref<1x128xf32, #tpu.memory_space<vmem>>, %arg4: memref<128x128xbf16, #tpu.memory_space<vmem>>, %arg5: memref<1x128xf32, #tpu.memory_space<vmem>>, %arg6: memref<128x4xbf16, #tpu.memory_space<vmem>>, %arg7: memref<1x4xf32, #tpu.memory_space<vmem>>, %arg8: memref<8x4xf32, #tpu.memory_space<vmem>>) attributes {dimension_semantics = [#tpu.dimension_semantics<parallel>], iteration_bounds = array<i64: 1>, scalar_prefetch = 0 : i64, scratch_operands = 0 : i64, tpu.core_type = #tpu.core_type<tc>, window_params = [{transform_indices = @transform_0, window_bounds = array<i64: 8, 8>}, {pipeline_mode = #tpu.pipeline_mode<synchronous>, transform_indices = @transform_1, window_bounds = array<i64: 8, 128>}, {pipeline_mode = #tpu.pipeline_mode<synchronous>, transform_indices = @transform_2, window_bounds = array<i64: 1, 128>}, {pipeline_mode = #tpu.pipeline_mode<synchronous>, transform_indices = @transform_3, window_bounds = array<i64: 128, 128>}, {pipeline_mode = #tpu.pipeline_mode<synchronous>, transform_indices = @transform_4, window_bounds = array<i64: 1, 128>}, {pipeline_mode = #tpu.pipeline_mode<synchronous>, transform_indices = @transform_5, window_bounds = array<i64: 128, 4>}, {pipeline_mode = #tpu.pipeline_mode<synchronous>, transform_indices = @transform_6, window_bounds = array<i64: 1, 4>}, {transform_indices = @transform_7, window_bounds = array<i64: 8, 4>}]} {
    %c0 = arith.constant 0 : index
    %c0_0 = arith.constant 0 : index
    %0 = vector.load %arg1[%c0, %c0_0] : memref<8x8xf32, #tpu.memory_space<vmem>>, vector<8x8xf32>
    %1 = arith.truncf %0 : vector<8x8xf32> to vector<8x8xbf16>
    %c0_1 = arith.constant 0 : index
    %c0_2 = arith.constant 0 : index
    %2 = vector.load %arg2[%c0_1, %c0_2] : memref<8x128xbf16, #tpu.memory_space<vmem>>, vector<8x128xbf16>
    %cst = arith.constant dense<0.000000e+00> : vector<8x128xf32>
    %3 = tpu.matmul %1, %2, %cst {dimension_numbers = #tpu.dot_dimension_numbers<[1], [0], [0], [1], [0, 0, 1, 1], [], []>} : vector<8x8xbf16>, vector<8x128xbf16>, vector<8x128xf32> -> vector<8x128xf32>
    %c0_3 = arith.constant 0 : index
    %c0_4 = arith.constant 0 : index
    %4 = vector.load %arg3[%c0_3, %c0_4] : memref<1x128xf32, #tpu.memory_space<vmem>>, vector<1x128xf32>
    %5 = vector.broadcast %4 : vector<1x128xf32> to vector<8x128xf32>
    %6 = arith.addf %3, %5 : vector<8x128xf32>
    %cst_5 = arith.constant 0.000000e+00 : f32
    %7 = vector.broadcast %cst_5 : f32 to vector<8x128xf32>
    %8 = arith.maximumf %6, %7 : vector<8x128xf32>
    %9 = arith.truncf %8 : vector<8x128xf32> to vector<8x128xbf16>
    %c0_6 = arith.constant 0 : index
    %c0_7 = arith.constant 0 : index
    %10 = vector.load %arg4[%c0_6, %c0_7] : memref<128x128xbf16, #tpu.memory_space<vmem>>, vector<128x128xbf16>
    %cst_8 = arith.constant dense<0.000000e+00> : vector<8x128xf32>
    %11 = tpu.matmul %9, %10, %cst_8 {dimension_numbers = #tpu.dot_dimension_numbers<[1], [0], [0], [1], [0, 0, 1, 1], [], []>} : vector<8x128xbf16>, vector<128x128xbf16>, vector<8x128xf32> -> vector<8x128xf32>
    %c0_9 = arith.constant 0 : index
    %c0_10 = arith.constant 0 : index
    %12 = vector.load %arg5[%c0_9, %c0_10] : memref<1x128xf32, #tpu.memory_space<vmem>>, vector<1x128xf32>
    %13 = vector.broadcast %12 : vector<1x128xf32> to vector<8x128xf32>
    %14 = arith.addf %11, %13 : vector<8x128xf32>
    %cst_11 = arith.constant 0.000000e+00 : f32
    %15 = vector.broadcast %cst_11 : f32 to vector<8x128xf32>
    %16 = arith.maximumf %14, %15 : vector<8x128xf32>
    %17 = arith.truncf %16 : vector<8x128xf32> to vector<8x128xbf16>
    %c0_12 = arith.constant 0 : index
    %c0_13 = arith.constant 0 : index
    %18 = vector.load %arg6[%c0_12, %c0_13] : memref<128x4xbf16, #tpu.memory_space<vmem>>, vector<128x4xbf16>
    %cst_14 = arith.constant dense<0.000000e+00> : vector<8x4xf32>
    %19 = tpu.matmul %17, %18, %cst_14 {dimension_numbers = #tpu.dot_dimension_numbers<[1], [0], [0], [1], [0, 0, 1, 1], [], []>} : vector<8x128xbf16>, vector<128x4xbf16>, vector<8x4xf32> -> vector<8x4xf32>
    %c0_15 = arith.constant 0 : index
    %c0_16 = arith.constant 0 : index
    %20 = vector.load %arg7[%c0_15, %c0_16] : memref<1x4xf32, #tpu.memory_space<vmem>>, vector<1x4xf32>
    %21 = vector.broadcast %20 : vector<1x4xf32> to vector<8x4xf32>
    %22 = arith.addf %19, %21 : vector<8x4xf32>
    %23 = math.tanh %22 : vector<8x4xf32>
    %c0_17 = arith.constant 0 : index
    %c0_18 = arith.constant 0 : index
    %24 = vector.load %arg8[%c0_17, %c0_18] : memref<8x4xf32, #tpu.memory_space<vmem>>, vector<8x4xf32>
    tpu.vector_store %arg8[%c0_17, %c0_18], %23 {strides = array<i32>} : memref<8x4xf32, #tpu.memory_space<vmem>>, vector<8x4xf32>,
    return
  }
  func.func @transform_0(%arg0: i32) -> (i32, i32) {
    %c0_i32 = arith.constant 0 : i32
    %c0_i32_0 = arith.constant 0 : i32
    return %arg0, %c0_i32 : i32, i32
  }
  func.func @transform_1(%arg0: i32) -> (i32, i32) {
    %c0_i32 = arith.constant 0 : i32
    %c0_i32_0 = arith.constant 0 : i32
    %c0_i32_1 = arith.constant 0 : i32
    return %c0_i32, %c0_i32_0 : i32, i32
  }
  func.func @transform_2(%arg0: i32) -> (i32, i32) {
    %c0_i32 = arith.constant 0 : i32
    %c0_i32_0 = arith.constant 0 : i32
    %c0_i32_1 = arith.constant 0 : i32
    return %c0_i32, %c0_i32_0 : i32, i32
  }
  func.func @transform_3(%arg0: i32) -> (i32, i32) {
    %c0_i32 = arith.constant 0 : i32
    %c0_i32_0 = arith.constant 0 : i32
    %c0_i32_1 = arith.constant 0 : i32
    return %c0_i32, %c0_i32_0 : i32, i32
  }
  func.func @transform_4(%arg0: i32) -> (i32, i32) {
    %c0_i32 = arith.constant 0 : i32
    %c0_i32_0 = arith.constant 0 : i32
    %c0_i32_1 = arith.constant 0 : i32
    return %c0_i32, %c0_i32_0 : i32, i32
  }
  func.func @transform_5(%arg0: i32) -> (i32, i32) {
    %c0_i32 = arith.constant 0 : i32
    %c0_i32_0 = arith.constant 0 : i32
    %c0_i32_1 = arith.constant 0 : i32
    return %c0_i32, %c0_i32_0 : i32, i32
  }
  func.func @transform_6(%arg0: i32) -> (i32, i32) {
    %c0_i32 = arith.constant 0 : i32
    %c0_i32_0 = arith.constant 0 : i32
    %c0_i32_1 = arith.constant 0 : i32
    return %c0_i32, %c0_i32_0 : i32, i32
  }
  func.func @transform_7(%arg0: i32) -> (i32, i32) {
    %c0_i32 = arith.constant 0 : i32
    %c0_i32_0 = arith.constant 0 : i32
    return %arg0, %c0_i32 : i32, i32
  }
}

</mosaic_0001>

<llo_original>
// kernel: tpu_custom_call.1
$region0: #{tpu_custom_call.1}
  #allocation0 [shape = 'u32[]', space=smem, size = 0x4, offset = 0x4, fixed_abs, tag = 'smem constant byte address 0x4 - core index']
  #allocation1 [shape = 'u32[144,128]{1,0:T(1,128)}', space=vmem, size = 0x12000, scoped, tag = 'internal scratch']
  %s0 = inlined_call_operand.vmem [shape: f32[8,8], index: 0, kind: input, shape index: {}]
  %s1 = inlined_call_operand.vmem [shape: bf16[8,128], index: 1, kind: input, shape index: {}]
  %s2 = inlined_call_operand.vmem [shape: f32[1,128], index: 2, kind: input, shape index: {}]
  %s3 = inlined_call_operand.vmem [shape: bf16[128,128], index: 3, kind: input, shape index: {}]
  %s4 = inlined_call_operand.vmem [shape: f32[1,128], index: 4, kind: input, shape index: {}]
  %s5 = inlined_call_operand.vmem [shape: bf16[128,4], index: 5, kind: input, shape index: {}]
  %s6 = inlined_call_operand.vmem [shape: f32[1,4], index: 6, kind: input, shape index: {}]
  %s7 = inlined_call_operand.vmem [shape: f32[8,4], index: 7, kind: output, shape index: {}]
  %s8 = sld [smem:[#allocation0]]
  $region38: #{tpu_custom_call.1} parent=0
    _
  %s10 = ssub.s32 1, %s8
  %s11 = scalar_select 0, %s10, %s8
  // Predicated region
  $region2: #{tpu_custom_call.1} parent=0 // pred_check
    _
  $region3: #{tpu_custom_call.1} parent=0 // pred_check_branch
    %13 = sbr.rel (0) target = $region5
  $region4: #{tpu_custom_call.1} parent=0 // pred_region
    _
  $region5: #{tpu_custom_call.1} parent=0 // pred_fallthru
    _
  // Predicated region
  $region6: #{tpu_custom_call.1} parent=0 // pred_check
    _
  $region7: #{tpu_custom_call.1} parent=0 // pred_check_branch
    %15 = sbr.rel (0) target = $region9
  $region8: #{tpu_custom_call.1} parent=0 // pred_region
    _
  $region9: #{tpu_custom_call.1} parent=0 // pred_fallthru
    _
  // Predicated region
  $region10: #{tpu_custom_call.1} parent=0 // pred_check
    _
  $region11: #{tpu_custom_call.1} parent=0 // pred_check_branch
    %17 = sbr.rel (0) target = $region13
  $region12: #{tpu_custom_call.1} parent=0 // pred_region
    _
  $region13: #{tpu_custom_call.1} parent=0 // pred_fallthru
    _
  // Predicated region
  $region14: #{tpu_custom_call.1} parent=0 // pred_check
    _
  $region15: #{tpu_custom_call.1} parent=0 // pred_check_branch
    %19 = sbr.rel (0) target = $region17
  $region16: #{tpu_custom_call.1} parent=0 // pred_region
    _
  $region17: #{tpu_custom_call.1} parent=0 // pred_fallthru
    _
  // Predicated region
  $region18: #{tpu_custom_call.1} parent=0 // pred_check
    _
  $region19: #{tpu_custom_call.1} parent=0 // pred_check_branch
    %21 = sbr.rel (0) target = $region21
  $region20: #{tpu_custom_call.1} parent=0 // pred_region
    _
  $region21: #{tpu_custom_call.1} parent=0 // pred_fallthru
    _
  // Predicated region
  $region22: #{tpu_custom_call.1} parent=0 // pred_check
    _
  $region23: #{tpu_custom_call.1} parent=0 // pred_check_branch
    %23 = sbr.rel (0) target = $region25
  $region24: #{tpu_custom_call.1} parent=0 // pred_region
    _
  $region25: #{tpu_custom_call.1} parent=0 // pred_fallthru
    _
  // Predicated region
  $region26: #{tpu_custom_call.1} parent=0 // pred_check
    _
  $region27: #{tpu_custom_call.1} parent=0 // pred_check_branch
    %25 = sbr.rel (0) target = $region29
  $region28: #{tpu_custom_call.1} parent=0 // pred_region
    _
  $region29: #{tpu_custom_call.1} parent=0 // pred_fallthru
    _
  %v27 = vld [vmem:[%s0] sm:$0xff]
  %v28 = vpack.c.bf16 %v27, %v27
  %v29 = vld [vmem:[%s1] sm:$0xf]
  %v30 = vld [vmem:[%s2] sm:$0x1]
  %v32 = vlaneseq
  %v33 = vshrl.u32 %v32, 7
  %v34 = vsub.s32 0, %v33
  %v35 = vrot.slane %v30, %v34
  %vm37 = vcmask 64512
  %v39 = vsel %vm37, %v28, 0
  %vm41 = vcmask 1043456
  %v43 = vsel %vm41, %v29, 0
  %45 = vmatprep.subr.bf16.mxu0 0
  %46 = vmatpush1.bf16.msra.mxu0 %v43
  %47 = vmatprep.subr.bf16.mxu0 0
  %48 = vmatpush1.bf16.msra.mxu0 0
  %49 = vmatprep.subr.bf16.mxu0 0
  %50 = vmatpush1.bf16.msra.mxu0 0
  %51 = vmatprep.subr.bf16.mxu0 0
  %52 = vmatpush1.bf16.msra.mxu0 0
  %53 = vmatprep.subr.bf16.mxu0 0
  %54 = vmatpush1.bf16.msra.mxu0 0
  %55 = vmatprep.subr.bf16.mxu0 0
  %56 = vmatpush1.bf16.msra.mxu0 0
  %57 = vmatprep.subr.bf16.mxu0 0
  %58 = vmatpush1.bf16.msra.mxu0 0
  %59 = vmatprep.subr.bf16.mxu0 0
  %60 = vmatpush1.bf16.msra.mxu0 0
  %61 = vmatprep.subr.bf16.mxu0 0
  %62 = vmatpush1.bf16.msra.mxu0 0
  %63 = vmatprep.subr.bf16.mxu0 0
  %64 = vmatpush1.bf16.msra.mxu0 0
  %65 = vmatprep.subr.bf16.mxu0 0
  %66 = vmatpush1.bf16.msra.mxu0 0
  %67 = vmatprep.subr.bf16.mxu0 0
  %68 = vmatpush1.bf16.msra.mxu0 0
  %69 = vmatprep.subr.bf16.mxu0 0
  %70 = vmatpush1.bf16.msra.mxu0 0
  %71 = vmatprep.subr.bf16.mxu0 0
  %72 = vmatpush1.bf16.msra.mxu0 0
  %73 = vmatprep.subr.bf16.mxu0 0
  %74 = vmatpush1.bf16.msra.mxu0 0
  %75 = vmatprep.subr.bf16.mxu0 0
  %76 = vmatpush1.bf16.msra.mxu0 0
  %77 = vmatprep.mubr.bf16.mxu0 0
  %78 = vmatmul.mubr.bf16.gmra.mrb[0].mxu0 %v39
  %v79 = vpop.f32.mrb[0].mxu0
  %v80 = vadd.f32 %v35, %v79
  %v81 = vpop.f32.mrb[0].mxu0
  %v82 = vpop.f32.mrb[0].mxu0
  %v83 = vpop.f32.mrb[0].mxu0
  %84 = vdwg.mxu0
  %v85 = vmax.f32 %v80, 0.0
  %v86 = vpack.c.bf16 %v85, %v85
  %v87 = vld [vmem:[%s3] sm:$0xf]
  %v88 = vld [vmem:[%s3 + $0x4] sm:$0xf]
  %v89 = vld [vmem:[%s3 + $0x8] sm:$0xf]
  %v90 = vld [vmem:[%s3 + $0xc] sm:$0xf]
  %v91 = vld [vmem:[%s3 + $0x10] sm:$0xf]
  %v92 = vld [vmem:[%s3 + $0x14] sm:$0xf]
  %v93 = vld [vmem:[%s3 + $0x18] sm:$0xf]
  %v94 = vld [vmem:[%s3 + $0x1c] sm:$0xf]
  %v95 = vld [vmem:[%s3 + $0x20] sm:$0xf]
  %v96 = vld [vmem:[%s3 + $0x24] sm:$0xf]
  %v97 = vld [vmem:[%s3 + $0x28] sm:$0xf]
  %v98 = vld [vmem:[%s3 + $0x2c] sm:$0xf]
  %v99 = vld [vmem:[%s3 + $0x30] sm:$0xf]
  %v100 = vld [vmem:[%s3 + $0x34] sm:$0xf]
  %v101 = vld [vmem:[%s3 + $0x38] sm:$0xf]
  %v102 = vld [vmem:[%s3 + $0x3c] sm:$0xf]
  %v103 = vld [vmem:[%s4] sm:$0x1]
  %v105 = vlaneseq
  %v106 = vshrl.u32 %v105, 7
  %v107 = vsub.s32 0, %v106
  %v108 = vrot.slane %v103, %v107
  %v126 = vunpack.c.l.b16 %v87
  %v127 = vunpack.c.l.b16 %v88
  %v128 = vunpack.c.l.b16 %v89
  %v129 = vunpack.c.l.b16 %v90
  %v130 = vunpack.c.l.b16 %v91
  %v131 = vunpack.c.l.b16 %v92
  %v132 = vunpack.c.l.b16 %v93
  %v133 = vunpack.c.l.b16 %v94
  %v134 = vunpack.c.l.b16 %v95
  %v135 = vunpack.c.l.b16 %v96
  %v136 = vunpack.c.l.b16 %v97
  %v137 = vunpack.c.l.b16 %v98
  %v138 = vunpack.c.l.b16 %v99
  %v139 = vunpack.c.l.b16 %v100
  %v140 = vunpack.c.l.b16 %v101
  %v141 = vunpack.c.l.b16 %v102
  %v142 = vpack.c.b16 %v127, %v126
  %v143 = vpack.c.b16 %v129, %v128
  %v144 = vpack.c.b16 %v131, %v130
  %v145 = vpack.c.b16 %v133, %v132
  %v146 = vpack.c.b16 %v135, %v134
  %v147 = vpack.c.b16 %v137, %v136
  %v148 = vpack.c.b16 %v139, %v138
  %v149 = vpack.c.b16 %v141, %v140
  %158 = vmatprep.subr.bf16.mxu0 0
  %159 = vmatpush1.bf16.msra.mxu0 %v142
  %160 = vmatprep.subr.bf16.mxu0 0
  %161 = vmatpush1.bf16.msra.mxu0 %v143
  %162 = vmatprep.subr.bf16.mxu0 0
  %163 = vmatpush1.bf16.msra.mxu0 %v144
  %164 = vmatprep.subr.bf16.mxu0 0
  %165 = vmatpush1.bf16.msra.mxu0 %v145
  %166 = vmatprep.subr.bf16.mxu0 0
  %167 = vmatpush1.bf16.msra.mxu0 %v146
  %168 = vmatprep.subr.bf16.mxu0 0
  %169 = vmatpush1.bf16.msra.mxu0 %v147
  %170 = vmatprep.subr.bf16.mxu0 0
  %171 = vmatpush1.bf16.msra.mxu0 %v148
  %172 = vmatprep.subr.bf16.mxu0 0
  %173 = vmatpush1.bf16.msra.mxu0 %v149
  %174 = vmatprep.subr.bf16.mxu0 0
  %175 = vmatpush1.bf16.msra.mxu0 0
  %176 = vmatprep.subr.bf16.mxu0 0
  %177 = vmatpush1.bf16.msra.mxu0 0
  %178 = vmatprep.subr.bf16.mxu0 0
  %179 = vmatpush1.bf16.msra.mxu0 0
  %180 = vmatprep.subr.bf16.mxu0 0
  %181 = vmatpush1.bf16.msra.mxu0 0
  %182 = vmatprep.subr.bf16.mxu0 0
  %183 = vmatpush1.bf16.msra.mxu0 0
  %184 = vmatprep.subr.bf16.mxu0 0
  %185 = vmatpush1.bf16.msra.mxu0 0
  %186 = vmatprep.subr.bf16.mxu0 0
  %187 = vmatpush1.bf16.msra.mxu0 0
  %188 = vmatprep.subr.bf16.mxu0 0
  %189 = vmatpush1.bf16.msra.mxu0 0
  %190 = vmatprep.mubr.bf16.mxu0 0
  %191 = vmatmul.mubr.bf16.gmra.mrb[0].mxu0 %v86
  %v192 = vpop.f32.mrb[0].mxu0
  %v193 = vadd.f32 %v108, %v192
  %v194 = vpop.f32.mrb[0].mxu0
  %v195 = vpop.f32.mrb[0].mxu0
  %v196 = vpop.f32.mrb[0].mxu0
  %197 = vdwg.mxu0
  %v198 = vmax.f32 %v193, 0.0
  %v199 = vpack.c.bf16 %v198, %v198
  %v200 = vld [vmem:[%s5] sm:$0xf]
  %v201 = vld [vmem:[%s5 + $0x4] sm:$0xf]
  %v202 = vld [vmem:[%s5 + $0x8] sm:$0xf]
  %v203 = vld [vmem:[%s5 + $0xc] sm:$0xf]
  %v204 = vld [vmem:[%s5 + $0x10] sm:$0xf]
  %v205 = vld [vmem:[%s5 + $0x14] sm:$0xf]
  %v206 = vld [vmem:[%s5 + $0x18] sm:$0xf]
  %v207 = vld [vmem:[%s5 + $0x1c] sm:$0xf]
  %v208 = vld [vmem:[%s5 + $0x20] sm:$0xf]
  %v209 = vld [vmem:[%s5 + $0x24] sm:$0xf]
  %v210 = vld [vmem:[%s5 + $0x28] sm:$0xf]
  %v211 = vld [vmem:[%s5 + $0x2c] sm:$0xf]
  %v212 = vld [vmem:[%s5 + $0x30] sm:$0xf]
  %v213 = vld [vmem:[%s5 + $0x34] sm:$0xf]
  %v214 = vld [vmem:[%s5 + $0x38] sm:$0xf]
  %v215 = vld [vmem:[%s5 + $0x3c] sm:$0xf]
  %v216 = vld [vmem:[%s6] sm:$0x1]
  %v218 = vlaneseq
  %v219 = vshrl.u32 %v218, 7
  %v220 = vsub.s32 0, %v219
  %v221 = vrot.slane %v216, %v220
  %v239 = vunpack.c.l.b16 %v200
  %v240 = vunpack.c.l.b16 %v201
  %v241 = vunpack.c.l.b16 %v202
  %v242 = vunpack.c.l.b16 %v203
  %v243 = vunpack.c.l.b16 %v204
  %v244 = vunpack.c.l.b16 %v205
  %v245 = vunpack.c.l.b16 %v206
  %v246 = vunpack.c.l.b16 %v207
  %v247 = vunpack.c.l.b16 %v208
  %v248 = vunpack.c.l.b16 %v209
  %v249 = vunpack.c.l.b16 %v210
  %v250 = vunpack.c.l.b16 %v211
  %v251 = vunpack.c.l.b16 %v212
  %v252 = vunpack.c.l.b16 %v213
  %v253 = vunpack.c.l.b16 %v214
  %v254 = vunpack.c.l.b16 %v215
  %v255 = vpack.c.b16 %v240, %v239
  %v256 = vpack.c.b16 %v242, %v241
  %v257 = vpack.c.b16 %v244, %v243
  %v258 = vpack.c.b16 %v246, %v245
  %v259 = vpack.c.b16 %v248, %v247
  %v260 = vpack.c.b16 %v250, %v249
  %v261 = vpack.c.b16 %v252, %v251
  %v262 = vpack.c.b16 %v254, %v253
  %271 = vmatprep.subr.bf16.mxu0 0
  %272 = vmatpush1.bf16.msra.mxu0 %v255
  %273 = vmatprep.subr.bf16.mxu0 0
  %274 = vmatpush1.bf16.msra.mxu0 %v256
  %275 = vmatprep.subr.bf16.mxu0 0
  %276 = vmatpush1.bf16.msra.mxu0 %v257
  %277 = vmatprep.subr.bf16.mxu0 0
  %278 = vmatpush1.bf16.msra.mxu0 %v258
  %279 = vmatprep.subr.bf16.mxu0 0
  %280 = vmatpush1.bf16.msra.mxu0 %v259
  %281 = vmatprep.subr.bf16.mxu0 0
  %282 = vmatpush1.bf16.msra.mxu0 %v260
  %283 = vmatprep.subr.bf16.mxu0 0
  %284 = vmatpush1.bf16.msra.mxu0 %v261
  %285 = vmatprep.subr.bf16.mxu0 0
  %286 = vmatpush1.bf16.msra.mxu0 %v262
  %287 = vmatprep.subr.bf16.mxu0 0
  %288 = vmatpush1.bf16.msra.mxu0 0
  %289 = vmatprep.subr.bf16.mxu0 0
  %290 = vmatpush1.bf16.msra.mxu0 0
  %291 = vmatprep.subr.bf16.mxu0 0
  %292 = vmatpush1.bf16.msra.mxu0 0
  %293 = vmatprep.subr.bf16.mxu0 0
  %294 = vmatpush1.bf16.msra.mxu0 0
  %295 = vmatprep.subr.bf16.mxu0 0
  %296 = vmatpush1.bf16.msra.mxu0 0
  %297 = vmatprep.subr.bf16.mxu0 0
  %298 = vmatpush1.bf16.msra.mxu0 0
  %299 = vmatprep.subr.bf16.mxu0 0
  %300 = vmatpush1.bf16.msra.mxu0 0
  %301 = vmatprep.subr.bf16.mxu0 0
  %302 = vmatpush1.bf16.msra.mxu0 0
  %303 = vmatprep.mubr.bf16.mxu0 0
  %304 = vmatmul.mubr.bf16.gmra.mrb[0].mxu0 %v199
  %v305 = vpop.f32.mrb[0].mxu0
  %v306 = vadd.f32 %v221, %v305
  %v307 = vpop.f32.mrb[0].mxu0
  %v308 = vpop.f32.mrb[0].mxu0
  %v309 = vpop.f32.mrb[0].mxu0
  %310 = vdwg.mxu0
  %v311 = vtanh.pop %v306
  %vm312 = vcmask 31744
  %313 = vst.msk [vmem:[%s7] sm:$0xff] %vm312, %v311
  // Predicated region
  $region30: #{tpu_custom_call.1} parent=0 // pred_check
    _
  $region31: #{tpu_custom_call.1} parent=0 // pred_check_branch
    %315 = sbr.rel (0) target = $region33
  $region32: #{tpu_custom_call.1} parent=0 // pred_region
    _
  $region33: #{tpu_custom_call.1} parent=0 // pred_fallthru
    _
  // Predicated region
  $region34: #{tpu_custom_call.1} parent=0 // pred_check
    _
  $region35: #{tpu_custom_call.1} parent=0 // pred_check_branch
    %317 = sbr.rel (0) target = $region37
  $region36: #{tpu_custom_call.1} parent=0 // pred_region
    _
  $region37: #{tpu_custom_call.1} parent=0 // pred_fallthru
    _

</llo_original>
